<compile_context>
chip_gen: v5e
topology: v5e:2x2
jax: 0.10.0
libtpu: 0.0.40
codegen_flags: <defaults>
</compile_context>

<pallas_src>
import jax
import jax.numpy as jnp
from jax.experimental import pallas as pl
from jax.experimental.pallas import tpu as pltpu


def linear_kernel(x_ref, p_ref, o_ref):
    # x: (B, 1) f32; p: (2, out_f) f32 with row 0 = weight^T, row 1 = bias.
    p = p_ref[...]
    w = p[0:1, :]                     # (1, out_f)
    b = p[1:2, :]                     # (1, out_f)
    # (B,1) * (1,out_f) + (1,out_f) broadcast FMA -> pure VPU work.
    o_ref[...] = (x_ref[...] * w + b).astype(o_ref.dtype)


def linear(x, params):
    """x: (B, 1) f32; params: (2, out_f) f32 (row 0 = w^T, row 1 = bias)."""
    B, in_f = x.shape
    out_f = params.shape[1]
    cost = pl.CostEstimate(
        flops=2 * B * out_f,
        transcendentals=0,
        bytes_accessed=4 * (B * in_f + 2 * out_f + B * out_f),
    )
    return pl.pallas_call(
        linear_kernel,
        out_shape=jax.ShapeDtypeStruct((B, out_f), x.dtype),
        in_specs=[
            pl.BlockSpec(memory_space=pltpu.MemorySpace.VMEM),
            pl.BlockSpec(memory_space=pltpu.MemorySpace.VMEM),
        ],
        out_specs=pl.BlockSpec(memory_space=pltpu.MemorySpace.VMEM),
        cost_estimate=cost,
    )(x, params)


if __name__ == "__main__":
    key = jax.random.PRNGKey(0)
    kx, kw, kb = jax.random.split(key, 3)

    B, in_f, out_f = 8, 1, 2
    x = jax.random.normal(kx, (B, in_f), dtype=jnp.float32)
    # nn.Linear(1, 2) parameters in torch layout: weight (out_f, in_f), bias (out_f,)
    weight = jax.random.normal(kw, (out_f, in_f), dtype=jnp.float32) * 0.5
    bias = jax.random.normal(kb, (out_f,), dtype=jnp.float32) * 0.1

    # One-time parameter preprocessing (param-init time, NOT the per-call hot path):
    # pack w^T and bias into a single (2, out_f) array -> one parameter DMA.
    params = jnp.concatenate(
        [weight.T, bias.reshape(1, out_f)], axis=0
    ).astype(jnp.float32)                                   # (2, out_f)

    out = jax.block_until_ready(linear(x, params))

    # Reference check against plain JAX (matches torch.nn.Linear forward).
    ref = x @ weight.T + bias
    assert out.shape == (B, out_f)
    assert jnp.allclose(out, ref, atol=1e-5), "mismatch vs reference"
    print("KERNEL_OK")
</pallas_src>

<mosaic_0001>
module attributes {stable_mosaic.version = 11 : i64} {
  func.func @linear_kernel(%arg0: memref<8x1xf32, #tpu.memory_space<vmem>>, %arg1: memref<2x2xf32, #tpu.memory_space<vmem>>, %arg2: memref<8x2xf32, #tpu.memory_space<vmem>>) attributes {dimension_semantics = [], scalar_prefetch = 0 : i64, scratch_operands = 0 : i64, tpu.core_type = #tpu.core_type<tc>} {
    %c0 = arith.constant 0 : index
    %c0_0 = arith.constant 0 : index
    %0 = vector.load %arg1[%c0, %c0_0] : memref<2x2xf32, #tpu.memory_space<vmem>>, vector<2x2xf32>
    %1 = vector.extract_strided_slice %0 {offsets = [0, 0], sizes = [1, 2], strides = [1, 1]} : vector<2x2xf32> to vector<1x2xf32>
    %2 = vector.extract_strided_slice %0 {offsets = [1, 0], sizes = [1, 2], strides = [1, 1]} : vector<2x2xf32> to vector<1x2xf32>
    %c0_1 = arith.constant 0 : index
    %c0_2 = arith.constant 0 : index
    %3 = vector.load %arg0[%c0_1, %c0_2] : memref<8x1xf32, #tpu.memory_space<vmem>>, vector<8x1xf32>
    %4 = vector.broadcast %3 : vector<8x1xf32> to vector<8x2xf32>
    %5 = vector.broadcast %1 : vector<1x2xf32> to vector<8x2xf32>
    %6 = arith.mulf %4, %5 : vector<8x2xf32>
    %7 = vector.broadcast %2 : vector<1x2xf32> to vector<8x2xf32>
    %8 = arith.addf %6, %7 : vector<8x2xf32>
    %c0_3 = arith.constant 0 : index
    %c0_4 = arith.constant 0 : index
    %9 = vector.load %arg2[%c0_3, %c0_4] : memref<8x2xf32, #tpu.memory_space<vmem>>, vector<8x2xf32>
    tpu.vector_store %arg2[%c0_3, %c0_4], %8 {strides = array<i32>} : memref<8x2xf32, #tpu.memory_space<vmem>>, vector<8x2xf32>,
    return
  }
}

</mosaic_0001>

<llo_original>
// kernel: tpu_custom_call.1
$region0: #{tpu_custom_call.1}
  #allocation0 [shape = 'u32[]', space=smem, size = 0x4, offset = 0x4, fixed_abs, tag = 'smem constant byte address 0x4 - core index']
  #allocation1 [shape = 'u32[72,128]{1,0:T(1,128)}', space=vmem, size = 0x9000, scoped, tag = 'internal scratch']
  %s0 = inlined_call_operand.vmem [shape: f32[8,1], index: 0, kind: input, shape index: {}]
  %s1 = inlined_call_operand.vmem [shape: f32[2,2], index: 1, kind: input, shape index: {}]
  %s2 = inlined_call_operand.vmem [shape: f32[8,2], index: 2, kind: output, shape index: {}]
  %s3 = sld [smem:[#allocation0]]
  $region18: #{tpu_custom_call.1} parent=0
    _
  %s5 = ssub.s32 1, %s3
  %s6 = scalar_select 0, %s5, %s3
  // Predicated region
  $region2: #{tpu_custom_call.1} parent=0 // pred_check
    _
  $region3: #{tpu_custom_call.1} parent=0 // pred_check_branch
    %8 = sbr.rel (0) target = $region5
  $region4: #{tpu_custom_call.1} parent=0 // pred_region
    _
  $region5: #{tpu_custom_call.1} parent=0 // pred_fallthru
    _
  // Predicated region
  $region6: #{tpu_custom_call.1} parent=0 // pred_check
    _
  $region7: #{tpu_custom_call.1} parent=0 // pred_check_branch
    %10 = sbr.rel (0) target = $region9
  $region8: #{tpu_custom_call.1} parent=0 // pred_region
    _
  $region9: #{tpu_custom_call.1} parent=0 // pred_fallthru
    _
  %v11 = vld [vmem:[%s1] sm:$0x3]
  %v12 = vld [vmem:[%s0] sm:$0xff]
  %14 = vset.pattern.permute.xlu0 0
  %15 = vperm.xlu0 %14, %v12
  %v16 = vpop.permute.xlu0 %15
  %v18 = vperm.slane %v11, 0
  %v19 = vmul.f32 %v16, %v18
  %v20 = vperm.slane %v11, 1
  %v21 = vadd.f32 %v19, %v20
  %vm22 = vcmask 15360
  %23 = vst.msk [vmem:[%s2] sm:$0xff] %vm22, %v21
  // Predicated region
  $region10: #{tpu_custom_call.1} parent=0 // pred_check
    _
  $region11: #{tpu_custom_call.1} parent=0 // pred_check_branch
    %25 = sbr.rel (0) target = $region13
  $region12: #{tpu_custom_call.1} parent=0 // pred_region
    _
  $region13: #{tpu_custom_call.1} parent=0 // pred_fallthru
    _
  // Predicated region
  $region14: #{tpu_custom_call.1} parent=0 // pred_check
    _
  $region15: #{tpu_custom_call.1} parent=0 // pred_check_branch
    %27 = sbr.rel (0) target = $region17
  $region16: #{tpu_custom_call.1} parent=0 // pred_region
    _
  $region17: #{tpu_custom_call.1} parent=0 // pred_fallthru
    _

</llo_original>
